<compile_context>
chip_gen: v5e
topology: v5e:2x2
jax: 0.10.0
libtpu: 0.0.40
codegen_flags: <defaults>
</compile_context>

<pallas_src>
import jax
import jax.numpy as jnp
from jax import lax
from jax.experimental import pallas as pl
from jax.experimental.pallas import tpu as pltpu

# ---------------- static config ----------------
B = 2
IN_DIM = 16          # input_dim (sequence length)
IN_CH = 4            # input_channels
CONV_DIMS = (8, 16)  # hidden_conv_dim
CONV_K = (3, 3)
CONV_S = (1, 1)
CONV_P = (1, 1)
POOL_K = (2, 2)
POOL_S = (2, 2)
HID_LIN = (32, 16)   # hidden_linear_dim
OUT_DIM = 5          # output_dim

# derived sequence lengths (same arithmetic as the PyTorch __init__)
L0 = IN_DIM
L1 = (L0 + 2 * CONV_P[0] - CONV_K[0]) // CONV_S[0] + 1    # 16 (after conv1)
L1P = (L1 - POOL_K[0]) // POOL_S[0] + 1                   # 8  (after maxpool)
L2 = (L1P + 2 * CONV_P[1] - CONV_K[1]) // CONV_S[1] + 1   # 8  (after conv2)
L2P = (L2 - POOL_K[1]) // POOL_S[1] + 1                   # 4  (after avgpool)
FLAT = CONV_DIMS[-1] * L2P                                # 64 (post_cnn_sequence_length)

KC1 = CONV_K[0] * IN_CH          # 12  im2col width of conv1
KC2 = CONV_K[1] * CONV_DIMS[0]   # 24  im2col width of conv2
RGROUP = 4                       # conv1 rows grouped by l % 4 (pool window x next-stage parity)
R = B * L2P                      # 8   rows per slab (= rows per l%4 group = rows per pooled parity)


# ---------------- Pallas kernel ----------------
def cnn1d_mlp_kernel(xcol_ref, w1_ref, b1_ref, w2_ref, b2_ref,
                     wl1_ref, bl1_ref, wl2_ref, bl2_ref, wl3_ref, bl3_ref,
                     out_ref, he_pad_ref, ho_pad_ref):
    # xcol_ref: (4*R, KC1) conv1 im2col operand.  Row = r*R + q*B + b where the
    # conv1 output position is l = 4*q + r  (ordering chosen in the wrapper so
    # pooling below is pure slab arithmetic).

    # ---- Conv1d #1: single fused im2col MXU matmul + bias + ReLU ----
    h = jnp.dot(xcol_ref[...], w1_ref[...], preferred_element_type=jnp.float32)
    h = jnp.maximum(h + b1_ref[...], 0.0)                       # (4*R, C1)

    # ---- MaxPool1d(k=2, s=2): pooled[2q]   = max(l=4q,   l=4q+1) -> slabs r=0,1
    #                           pooled[2q+1] = max(l=4q+2, l=4q+3) -> slabs r=2,3
    he = jnp.maximum(h[0 * R:1 * R, :], h[1 * R:2 * R, :])       # (R, C1) rows (q, b): pooled pos 2q
    ho = jnp.maximum(h[2 * R:3 * R, :], h[3 * R:4 * R, :])       # (R, C1) rows (q, b): pooled pos 2q+1

    # ---- conv2 "same" padding via zero-edged VMEM scratch (no concatenate copy) ----
    he_pad_ref[0:R, :] = he
    he_pad_ref[R:R + B, :] = jnp.zeros((B, CONV_DIMS[0]), jnp.float32)
    ho_pad_ref[0:B, :] = jnp.zeros((B, CONV_DIMS[0]), jnp.float32)
    ho_pad_ref[B:B + R, :] = ho
    ho_prev = ho_pad_ref[0:R, :]       # pooled[2p-1]  (zero rows at p=0)
    he_next = he_pad_ref[B:B + R, :]   # pooled[2p+2]  (zero rows at p=L2P-1)

    # ---- Conv1d #2: fused im2col (lane concat of the 3 taps) -> single MXU matmul
    #      even rows (p,b) -> conv2 output at position 2p, odd slab -> position 2p+1.
    even_col = jnp.concatenate([ho_prev, he, ho], axis=-1)       # (R, KC2)
    odd_col = jnp.concatenate([he, ho, he_next], axis=-1)        # (R, KC2)
    col = jnp.concatenate([even_col, odd_col], axis=0)           # (2R, KC2)
    g = jnp.dot(col, w2_ref[...], preferred_element_type=jnp.float32)
    g = jnp.tanh(g + b2_ref[...])                                # (2R, C2)

    # ---- AvgPool1d(k=2, s=2): average the even-position and odd-position slabs ----
    gavg = 0.5 * (g[0:R, :] + g[R:2 * R, :])                     # (R, C2), row = p*B + b

    # ---- Flatten + Linear1 without any cross-lane reshape:
    #      unrolled accumulation over the L2P pooled positions, wl1 kept (L2P, C2, H1).
    z = jnp.dot(gavg[0:B, :], wl1_ref[0], preferred_element_type=jnp.float32)
    for p in range(1, L2P):
        z = z + jnp.dot(gavg[p * B:(p + 1) * B, :], wl1_ref[p],
                        preferred_element_type=jnp.float32)
    z = jnp.maximum(z + bl1_ref[...], 0.0)                       # ReLU

    z = jnp.dot(z, wl2_ref[...], preferred_element_type=jnp.float32) + bl2_ref[...]
    z = jnp.where(z >= 0.0, z, 0.01 * z)                         # LeakyReLU(0.01)
    z = jnp.dot(z, wl3_ref[...], preferred_element_type=jnp.float32) + bl3_ref[...]
    out_ref[...] = jax.nn.sigmoid(z)                             # Sigmoid


# ---------------- wrapper (layout plumbing only) ----------------
@jax.jit
def cnn1d_mlp_forward(x_ncl, p):
    # NCL -> channels-last (B, L, C); zero pad along L for conv1's "same" padding.
    x_nlc = jnp.transpose(x_ncl, (0, 2, 1))
    xp = jnp.pad(x_nlc, ((0, 0), (CONV_P[0], CONV_P[0]), (0, 0)))      # (B, L0+2, Cin)

    # conv1 im2col: lane order [tap0 chans | tap1 chans | tap2 chans].
    cols = jnp.concatenate([xp[:, t:t + L1, :] for t in range(CONV_K[0])], axis=-1)  # (B, L1, KC1)
    # Reorder rows to (r, q, b) with l = 4q + r so the kernel's pooling is slab math.
    xcol = jnp.transpose(cols, (1, 0, 2))                 # (L1, B, KC1)   [l, b]
    xcol = xcol.reshape(L1 // RGROUP, RGROUP, B, KC1)     # [q, r, b]
    xcol = jnp.transpose(xcol, (1, 0, 2, 3))              # [r, q, b]
    xcol = xcol.reshape(RGROUP * R, KC1)                  # row = r*R + q*B + b

    # conv weights: torch (out, in, k) -> fused im2col weight (k*in, out).
    w1f = jnp.transpose(p['w1'], (2, 1, 0)).reshape(KC1, CONV_DIMS[0])
    w2f = jnp.transpose(p['w2'], (2, 1, 0)).reshape(KC2, CONV_DIMS[1])
    # first Linear: keep as (L2P, C2, H1); torch flatten row index is c*L2P + p.
    wl1_3d = p['wl1'].reshape(CONV_DIMS[1], L2P, HID_LIN[0]).transpose(1, 0, 2)

    args = (xcol,
            w1f, p['b1'].reshape(1, -1),
            w2f, p['b2'].reshape(1, -1),
            wl1_3d, p['bl1'].reshape(1, -1),
            p['wl2'], p['bl2'].reshape(1, -1),
            p['wl3'], p['bl3'].reshape(1, -1))

    return pl.pallas_call(
        cnn1d_mlp_kernel,
        out_shape=jax.ShapeDtypeStruct((B, OUT_DIM), jnp.float32),
        in_specs=[pl.BlockSpec(memory_space=pltpu.MemorySpace.VMEM)] * len(args),
        out_specs=pl.BlockSpec(memory_space=pltpu.MemorySpace.VMEM),
        scratch_shapes=[pltpu.VMEM((R + B, CONV_DIMS[0]), jnp.float32),   # he_pad
                        pltpu.VMEM((R + B, CONV_DIMS[0]), jnp.float32)],  # ho_pad
    )(*args)


# ---------------- deterministic params ----------------
def make_params(key):
    ks = jax.random.split(key, 10)

    def u(k, shape, scale):
        return jax.random.uniform(k, shape, jnp.float32, -1.0, 1.0) * scale

    return {
        'w1': u(ks[0], (CONV_DIMS[0], IN_CH, CONV_K[0]), 0.3),       # torch Conv1d (out, in, k)
        'b1': u(ks[1], (CONV_DIMS[0],), 0.1),
        'w2': u(ks[2], (CONV_DIMS[1], CONV_DIMS[0], CONV_K[1]), 0.3),
        'b2': u(ks[3], (CONV_DIMS[1],), 0.1),
        'wl1': u(ks[4], (FLAT, HID_LIN[0]), 0.2),                    # (in, out), rows in torch flatten order
        'bl1': u(ks[5], (HID_LIN[0],), 0.1),
        'wl2': u(ks[6], (HID_LIN[0], HID_LIN[1]), 0.2),
        'bl2': u(ks[7], (HID_LIN[1],), 0.1),
        'wl3': u(ks[8], (HID_LIN[1], OUT_DIM), 0.2),
        'bl3': u(ks[9], (OUT_DIM,), 0.1),
    }


# ---------------- plain-JAX reference (mirrors the PyTorch NCL forward) ----------------
def reference_forward(x_ncl, p):
    y = lax.conv_general_dilated(x_ncl, p['w1'], window_strides=(CONV_S[0],),
                                 padding=[(CONV_P[0], CONV_P[0])],
                                 dimension_numbers=('NCH', 'OIH', 'NCH'))
    y = y + p['b1'][None, :, None]
    y = jnp.maximum(y, 0.0)
    y = lax.reduce_window(y, -jnp.inf, lax.max, (1, 1, POOL_K[0]), (1, 1, POOL_S[0]), 'VALID')
    y = lax.conv_general_dilated(y, p['w2'], window_strides=(CONV_S[1],),
                                 padding=[(CONV_P[1], CONV_P[1])],
                                 dimension_numbers=('NCH', 'OIH', 'NCH'))
    y = y + p['b2'][None, :, None]
    y = jnp.tanh(y)
    y = lax.reduce_window(y, 0.0, lax.add, (1, 1, POOL_K[1]), (1, 1, POOL_S[1]), 'VALID') / POOL_K[1]
    z = y.reshape(B, -1)                              # nn.Flatten on (B, C, L)
    z = jnp.maximum(z @ p['wl1'] + p['bl1'], 0.0)
    h2 = z @ p['wl2'] + p['bl2']
    z = jnp.where(h2 >= 0.0, h2, 0.01 * h2)
    return jax.nn.sigmoid(z @ p['wl3'] + p['bl3'])


if __name__ == "__main__":
    key = jax.random.PRNGKey(0)
    kx, kp = jax.random.split(key)
    x = jax.random.normal(kx, (B, IN_CH, IN_DIM), jnp.float32)   # PyTorch NCL input
    params = make_params(kp)

    out = cnn1d_mlp_forward(x, params)
    out = jax.block_until_ready(out)

    ref = reference_forward(x, params)
    assert out.shape == (B, OUT_DIM)
    assert bool(jnp.allclose(out, ref, atol=1e-5, rtol=1e-5)), (out, ref)
    print("KERNEL_OK")
</pallas_src>

<mosaic_0001>
module attributes {stable_mosaic.version = 11 : i64} {
  func.func @cnn1d_mlp_kernel(%arg0: memref<32x12xf32, #tpu.memory_space<vmem>>, %arg1: memref<12x8xf32, #tpu.memory_space<vmem>>, %arg2: memref<1x8xf32, #tpu.memory_space<vmem>>, %arg3: memref<24x16xf32, #tpu.memory_space<vmem>>, %arg4: memref<1x16xf32, #tpu.memory_space<vmem>>, %arg5: memref<4x16x32xf32, #tpu.memory_space<vmem>>, %arg6: memref<1x32xf32, #tpu.memory_space<vmem>>, %arg7: memref<32x16xf32, #tpu.memory_space<vmem>>, %arg8: memref<1x16xf32, #tpu.memory_space<vmem>>, %arg9: memref<16x5xf32, #tpu.memory_space<vmem>>, %arg10: memref<1x5xf32, #tpu.memory_space<vmem>>, %arg11: memref<2x5xf32, #tpu.memory_space<vmem>>, %arg12: memref<10x8xf32, #tpu.memory_space<vmem>>, %arg13: memref<10x8xf32, #tpu.memory_space<vmem>>) attributes {dimension_semantics = [], scalar_prefetch = 0 : i64, scratch_operands = 2 : i64, tpu.core_type = #tpu.core_type<tc>} {
    %c0 = arith.constant 0 : index
    %c0_0 = arith.constant 0 : index
    %0 = vector.load %arg0[%c0, %c0_0] : memref<32x12xf32, #tpu.memory_space<vmem>>, vector<32x12xf32>
    %c0_1 = arith.constant 0 : index
    %c0_2 = arith.constant 0 : index
    %1 = vector.load %arg1[%c0_1, %c0_2] : memref<12x8xf32, #tpu.memory_space<vmem>>, vector<12x8xf32>
    %cst = arith.constant dense<0.000000e+00> : vector<32x8xf32>
    %2 = tpu.matmul %0, %1, %cst {dimension_numbers = #tpu.dot_dimension_numbers<[1], [0], [0], [1], [0, 0, 1, 1], [], []>} : vector<32x12xf32>, vector<12x8xf32>, vector<32x8xf32> -> vector<32x8xf32>
    %c0_3 = arith.constant 0 : index
    %c0_4 = arith.constant 0 : index
    %3 = vector.load %arg2[%c0_3, %c0_4] : memref<1x8xf32, #tpu.memory_space<vmem>>, vector<1x8xf32>
    %4 = vector.broadcast %3 : vector<1x8xf32> to vector<32x8xf32>
    %5 = arith.addf %2, %4 : vector<32x8xf32>
    %cst_5 = arith.constant 0.000000e+00 : f32
    %6 = vector.broadcast %cst_5 : f32 to vector<32x8xf32>
    %7 = arith.maximumf %5, %6 : vector<32x8xf32>
    %8 = vector.extract_strided_slice %7 {offsets = [0, 0], sizes = [8, 8], strides = [1, 1]} : vector<32x8xf32> to vector<8x8xf32>
    %9 = vector.extract_strided_slice %7 {offsets = [8, 0], sizes = [8, 8], strides = [1, 1]} : vector<32x8xf32> to vector<8x8xf32>
    %10 = arith.maximumf %8, %9 : vector<8x8xf32>
    %11 = vector.extract_strided_slice %7 {offsets = [16, 0], sizes = [8, 8], strides = [1, 1]} : vector<32x8xf32> to vector<8x8xf32>
    %12 = vector.extract_strided_slice %7 {offsets = [24, 0], sizes = [8, 8], strides = [1, 1]} : vector<32x8xf32> to vector<8x8xf32>
    %13 = arith.maximumf %11, %12 : vector<8x8xf32>
    %c0_6 = arith.constant 0 : index
    %c0_7 = arith.constant 0 : index
    %14 = vector.load %arg12[%c0_6, %c0_7] : memref<10x8xf32, #tpu.memory_space<vmem>>, vector<8x8xf32>
    tpu.vector_store %arg12[%c0_6, %c0_7], %10 {strides = array<i32>} : memref<10x8xf32, #tpu.memory_space<vmem>>, vector<8x8xf32>,
    %cst_8 = arith.constant 0.000000e+00 : f32
    %15 = vector.broadcast %cst_8 : f32 to vector<2x8xf32>
    %c8 = arith.constant 8 : index
    %c0_9 = arith.constant 0 : index
    %16 = vector.load %arg12[%c8, %c0_9] : memref<10x8xf32, #tpu.memory_space<vmem>>, vector<2x8xf32>
    tpu.vector_store %arg12[%c8, %c0_9], %15 {strides = array<i32>} : memref<10x8xf32, #tpu.memory_space<vmem>>, vector<2x8xf32>,
    %cst_10 = arith.constant 0.000000e+00 : f32
    %17 = vector.broadcast %cst_10 : f32 to vector<2x8xf32>
    %c0_11 = arith.constant 0 : index
    %c0_12 = arith.constant 0 : index
    %18 = vector.load %arg13[%c0_11, %c0_12] : memref<10x8xf32, #tpu.memory_space<vmem>>, vector<2x8xf32>
    tpu.vector_store %arg13[%c0_11, %c0_12], %17 {strides = array<i32>} : memref<10x8xf32, #tpu.memory_space<vmem>>, vector<2x8xf32>,
    %c2 = arith.constant 2 : index
    %c0_13 = arith.constant 0 : index
    %19 = vector.load %arg13[%c2, %c0_13] : memref<10x8xf32, #tpu.memory_space<vmem>>, vector<8x8xf32>
    tpu.vector_store %arg13[%c2, %c0_13], %13 {strides = array<i32>} : memref<10x8xf32, #tpu.memory_space<vmem>>, vector<8x8xf32>,
    %c0_14 = arith.constant 0 : index
    %c0_15 = arith.constant 0 : index
    %20 = vector.load %arg13[%c0_14, %c0_15] : memref<10x8xf32, #tpu.memory_space<vmem>>, vector<8x8xf32>
    %c2_16 = arith.constant 2 : index
    %c0_17 = arith.constant 0 : index
    %21 = vector.load %arg12[%c2_16, %c0_17] : memref<10x8xf32, #tpu.memory_space<vmem>>, vector<8x8xf32>
    %22 = tpu.concatenate %20, %10, %13 in 1 : vector<8x8xf32>, vector<8x8xf32>, vector<8x8xf32> -> vector<8x24xf32>
    %23 = tpu.concatenate %10, %13, %21 in 1 : vector<8x8xf32>, vector<8x8xf32>, vector<8x8xf32> -> vector<8x24xf32>
    %24 = tpu.concatenate %22, %23 in 0 : vector<8x24xf32>, vector<8x24xf32> -> vector<16x24xf32>
    %c0_18 = arith.constant 0 : index
    %c0_19 = arith.constant 0 : index
    %25 = vector.load %arg3[%c0_18, %c0_19] : memref<24x16xf32, #tpu.memory_space<vmem>>, vector<24x16xf32>
    %cst_20 = arith.constant dense<0.000000e+00> : vector<16x16xf32>
    %26 = tpu.matmul %24, %25, %cst_20 {dimension_numbers = #tpu.dot_dimension_numbers<[1], [0], [0], [1], [0, 0, 1, 1], [], []>} : vector<16x24xf32>, vector<24x16xf32>, vector<16x16xf32> -> vector<16x16xf32>
    %c0_21 = arith.constant 0 : index
    %c0_22 = arith.constant 0 : index
    %27 = vector.load %arg4[%c0_21, %c0_22] : memref<1x16xf32, #tpu.memory_space<vmem>>, vector<1x16xf32>
    %28 = vector.broadcast %27 : vector<1x16xf32> to vector<16x16xf32>
    %29 = arith.addf %26, %28 : vector<16x16xf32>
    %30 = math.tanh %29 : vector<16x16xf32>
    %31 = vector.extract_strided_slice %30 {offsets = [0, 0], sizes = [8, 16], strides = [1, 1]} : vector<16x16xf32> to vector<8x16xf32>
    %32 = vector.extract_strided_slice %30 {offsets = [8, 0], sizes = [8, 16], strides = [1, 1]} : vector<16x16xf32> to vector<8x16xf32>
    %33 = arith.addf %31, %32 : vector<8x16xf32>
    %cst_23 = arith.constant 5.000000e-01 : f32
    %34 = vector.broadcast %cst_23 : f32 to vector<8x16xf32>
    %35 = arith.mulf %34, %33 : vector<8x16xf32>
    %36 = vector.extract_strided_slice %35 {offsets = [0, 0], sizes = [2, 16], strides = [1, 1]} : vector<8x16xf32> to vector<2x16xf32>
    %c0_24 = arith.constant 0 : index
    %c0_25 = arith.constant 0 : index
    %c0_26 = arith.constant 0 : index
    %37 = vector.load %arg5[%c0_24, %c0_25, %c0_26] : memref<4x16x32xf32, #tpu.memory_space<vmem>>, vector<1x16x32xf32>
    %38 = vector.shape_cast %37 : vector<1x16x32xf32> to vector<16x32xf32>
    %cst_27 = arith.constant dense<0.000000e+00> : vector<2x32xf32>
    %39 = tpu.matmul %36, %38, %cst_27 {dimension_numbers = #tpu.dot_dimension_numbers<[1], [0], [0], [1], [0, 0, 1, 1], [], []>} : vector<2x16xf32>, vector<16x32xf32>, vector<2x32xf32> -> vector<2x32xf32>
    %40 = vector.extract_strided_slice %35 {offsets = [2, 0], sizes = [2, 16], strides = [1, 1]} : vector<8x16xf32> to vector<2x16xf32>
    %c1 = arith.constant 1 : index
    %c0_28 = arith.constant 0 : index
    %c0_29 = arith.constant 0 : index
    %41 = vector.load %arg5[%c1, %c0_28, %c0_29] : memref<4x16x32xf32, #tpu.memory_space<vmem>>, vector<1x16x32xf32>
    %42 = vector.shape_cast %41 : vector<1x16x32xf32> to vector<16x32xf32>
    %cst_30 = arith.constant dense<0.000000e+00> : vector<2x32xf32>
    %43 = tpu.matmul %40, %42, %cst_30 {dimension_numbers = #tpu.dot_dimension_numbers<[1], [0], [0], [1], [0, 0, 1, 1], [], []>} : vector<2x16xf32>, vector<16x32xf32>, vector<2x32xf32> -> vector<2x32xf32>
    %44 = arith.addf %39, %43 : vector<2x32xf32>
    %45 = vector.extract_strided_slice %35 {offsets = [4, 0], sizes = [2, 16], strides = [1, 1]} : vector<8x16xf32> to vector<2x16xf32>
    %c2_31 = arith.constant 2 : index
    %c0_32 = arith.constant 0 : index
    %c0_33 = arith.constant 0 : index
    %46 = vector.load %arg5[%c2_31, %c0_32, %c0_33] : memref<4x16x32xf32, #tpu.memory_space<vmem>>, vector<1x16x32xf32>
    %47 = vector.shape_cast %46 : vector<1x16x32xf32> to vector<16x32xf32>
    %cst_34 = arith.constant dense<0.000000e+00> : vector<2x32xf32>
    %48 = tpu.matmul %45, %47, %cst_34 {dimension_numbers = #tpu.dot_dimension_numbers<[1], [0], [0], [1], [0, 0, 1, 1], [], []>} : vector<2x16xf32>, vector<16x32xf32>, vector<2x32xf32> -> vector<2x32xf32>
    %49 = arith.addf %44, %48 : vector<2x32xf32>
    %50 = vector.extract_strided_slice %35 {offsets = [6, 0], sizes = [2, 16], strides = [1, 1]} : vector<8x16xf32> to vector<2x16xf32>
    %c3 = arith.constant 3 : index
    %c0_35 = arith.constant 0 : index
    %c0_36 = arith.constant 0 : index
    %51 = vector.load %arg5[%c3, %c0_35, %c0_36] : memref<4x16x32xf32, #tpu.memory_space<vmem>>, vector<1x16x32xf32>
    %52 = vector.shape_cast %51 : vector<1x16x32xf32> to vector<16x32xf32>
    %cst_37 = arith.constant dense<0.000000e+00> : vector<2x32xf32>
    %53 = tpu.matmul %50, %52, %cst_37 {dimension_numbers = #tpu.dot_dimension_numbers<[1], [0], [0], [1], [0, 0, 1, 1], [], []>} : vector<2x16xf32>, vector<16x32xf32>, vector<2x32xf32> -> vector<2x32xf32>
    %54 = arith.addf %49, %53 : vector<2x32xf32>
    %c0_38 = arith.constant 0 : index
    %c0_39 = arith.constant 0 : index
    %55 = vector.load %arg6[%c0_38, %c0_39] : memref<1x32xf32, #tpu.memory_space<vmem>>, vector<1x32xf32>
    %56 = vector.broadcast %55 : vector<1x32xf32> to vector<2x32xf32>
    %57 = arith.addf %54, %56 : vector<2x32xf32>
    %cst_40 = arith.constant 0.000000e+00 : f32
    %58 = vector.broadcast %cst_40 : f32 to vector<2x32xf32>
    %59 = arith.maximumf %57, %58 : vector<2x32xf32>
    %c0_41 = arith.constant 0 : index
    %c0_42 = arith.constant 0 : index
    %60 = vector.load %arg7[%c0_41, %c0_42] : memref<32x16xf32, #tpu.memory_space<vmem>>, vector<32x16xf32>
    %cst_43 = arith.constant dense<0.000000e+00> : vector<2x16xf32>
    %61 = tpu.matmul %59, %60, %cst_43 {dimension_numbers = #tpu.dot_dimension_numbers<[1], [0], [0], [1], [0, 0, 1, 1], [], []>} : vector<2x32xf32>, vector<32x16xf32>, vector<2x16xf32> -> vector<2x16xf32>
    %c0_44 = arith.constant 0 : index
    %c0_45 = arith.constant 0 : index
    %62 = vector.load %arg8[%c0_44, %c0_45] : memref<1x16xf32, #tpu.memory_space<vmem>>, vector<1x16xf32>
    %63 = vector.broadcast %62 : vector<1x16xf32> to vector<2x16xf32>
    %64 = arith.addf %61, %63 : vector<2x16xf32>
    %cst_46 = arith.constant 0.000000e+00 : f32
    %65 = vector.broadcast %cst_46 : f32 to vector<2x16xf32>
    %66 = arith.cmpf oge, %64, %65 : vector<2x16xf32>
    %cst_47 = arith.constant 0.00999999977 : f32
    %67 = vector.broadcast %cst_47 : f32 to vector<2x16xf32>
    %68 = arith.mulf %67, %64 : vector<2x16xf32>
    %69 = arith.select %66, %64, %68 : vector<2x16xi1>, vector<2x16xf32>
    %c0_48 = arith.constant 0 : index
    %c0_49 = arith.constant 0 : index
    %70 = vector.load %arg9[%c0_48, %c0_49] : memref<16x5xf32, #tpu.memory_space<vmem>>, vector<16x5xf32>
    %cst_50 = arith.constant dense<0.000000e+00> : vector<2x5xf32>
    %71 = tpu.matmul %69, %70, %cst_50 {dimension_numbers = #tpu.dot_dimension_numbers<[1], [0], [0], [1], [0, 0, 1, 1], [], []>} : vector<2x16xf32>, vector<16x5xf32>, vector<2x5xf32> -> vector<2x5xf32>
    %c0_51 = arith.constant 0 : index
    %c0_52 = arith.constant 0 : index
    %72 = vector.load %arg10[%c0_51, %c0_52] : memref<1x5xf32, #tpu.memory_space<vmem>>, vector<1x5xf32>
    %73 = vector.broadcast %72 : vector<1x5xf32> to vector<2x5xf32>
    %74 = arith.addf %71, %73 : vector<2x5xf32>
    %75 = arith.negf %74 : vector<2x5xf32>
    %76 = math.exp %75 : vector<2x5xf32>
    %cst_53 = arith.constant 1.000000e+00 : f32
    %77 = vector.broadcast %cst_53 : f32 to vector<2x5xf32>
    %78 = arith.addf %77, %76 : vector<2x5xf32>
    %79 = arith.divf %77, %78 : vector<2x5xf32>
    %c0_54 = arith.constant 0 : index
    %c0_55 = arith.constant 0 : index
    %80 = vector.load %arg11[%c0_54, %c0_55] : memref<2x5xf32, #tpu.memory_space<vmem>>, vector<2x5xf32>
    tpu.vector_store %arg11[%c0_54, %c0_55], %79 {strides = array<i32>} : memref<2x5xf32, #tpu.memory_space<vmem>>, vector<2x5xf32>,
    return
  }
}

</mosaic_0001>

<llo_original>
// kernel: cnn1d_mlp_forward.1
$region0: #{cnn1d_mlp_forward.1}
  #allocation0 [shape = 'u32[]', space=smem, size = 0x4, offset = 0x4, fixed_abs, tag = 'smem constant byte address 0x4 - core index']
  #allocation1 [shape = 'u32[72,128]{1,0:T(1,128)}', space=vmem, size = 0x9000, scoped, tag = 'internal scratch']
  #allocation2 [shape = 'f32[10,8]{1,0:T(8,128)}', space=vmem, size = 0x2000, scoped, tag = 'scratch operand']
  #allocation3 [shape = 'f32[10,8]{1,0:T(8,128)}', space=vmem, size = 0x2000, scoped, tag = 'scratch operand']
  %s0 = inlined_call_operand.vmem [shape: f32[32,12], index: 0, kind: input, shape index: {}]
  %s1 = inlined_call_operand.vmem [shape: f32[12,8], index: 1, kind: input, shape index: {}]
  %s2 = inlined_call_operand.vmem [shape: f32[1,8], index: 2, kind: input, shape index: {}]
  %s3 = inlined_call_operand.vmem [shape: f32[24,16], index: 3, kind: input, shape index: {}]
  %s4 = inlined_call_operand.vmem [shape: f32[1,16], index: 4, kind: input, shape index: {}]
  %s5 = inlined_call_operand.vmem [shape: f32[4,16,32], index: 5, kind: input, shape index: {}]
  %s6 = inlined_call_operand.vmem [shape: f32[1,32], index: 6, kind: input, shape index: {}]
  %s7 = inlined_call_operand.vmem [shape: f32[32,16], index: 7, kind: input, shape index: {}]
  %s8 = inlined_call_operand.vmem [shape: f32[1,16], index: 8, kind: input, shape index: {}]
  %s9 = inlined_call_operand.vmem [shape: f32[16,5], index: 9, kind: input, shape index: {}]
  %s10 = inlined_call_operand.vmem [shape: f32[1,5], index: 10, kind: input, shape index: {}]
  %s11 = inlined_call_operand.hbm [shape: f32[2,5], index: 11, kind: output, shape index: {}]
  %s12 = sld [smem:[#allocation0]]
  $region54: #{cnn1d_mlp_forward.1} parent=0
    _
  %s14 = ssub.s32 1, %s12
  %s15 = scalar_select 0, %s14, %s12
  $region1: #{cnn1d_mlp_forward.1} parent=0
    #allocation4 [shape = 'u8[1024]{0}', space=vmem, size = 0x400, scoped, tag = 'output window, operand 0, single buffered']
    #allocation5 [shape = 's32[1]{0}', space=sflag, size = 0x4, scoped, tag = 'scoped memory for cnn1d_mlp_forward.1']
    %16 = vsyncpa [#allocation5], 0
    // Predicated region
    $region2: #{cnn1d_mlp_forward.1} parent=1 // pred_check
      _
    $region3: #{cnn1d_mlp_forward.1} parent=1 // pred_check_branch
      %18 = sbr.rel (0) target = $region5
    $region4: #{cnn1d_mlp_forward.1} parent=1 // pred_region
      _
    $region5: #{cnn1d_mlp_forward.1} parent=1 // pred_fallthru
      _
    // Predicated region
    $region6: #{cnn1d_mlp_forward.1} parent=1 // pred_check
      _
    $region7: #{cnn1d_mlp_forward.1} parent=1 // pred_check_branch
      %20 = sbr.rel (0) target = $region9
    $region8: #{cnn1d_mlp_forward.1} parent=1 // pred_region
      _
    $region9: #{cnn1d_mlp_forward.1} parent=1 // pred_fallthru
      _
    // Predicated region
    $region10: #{cnn1d_mlp_forward.1} parent=1 // pred_check
      _
    $region11: #{cnn1d_mlp_forward.1} parent=1 // pred_check_branch
      %22 = sbr.rel (0) target = $region13
    $region12: #{cnn1d_mlp_forward.1} parent=1 // pred_region
      _
    $region13: #{cnn1d_mlp_forward.1} parent=1 // pred_fallthru
      _
    // Predicated region
    $region14: #{cnn1d_mlp_forward.1} parent=1 // pred_check
      _
    $region15: #{cnn1d_mlp_forward.1} parent=1 // pred_check_branch
      %24 = sbr.rel (0) target = $region17
    $region16: #{cnn1d_mlp_forward.1} parent=1 // pred_region
      _
    $region17: #{cnn1d_mlp_forward.1} parent=1 // pred_fallthru
      _
    // Predicated region
    $region18: #{cnn1d_mlp_forward.1} parent=1 // pred_check
      _
    $region19: #{cnn1d_mlp_forward.1} parent=1 // pred_check_branch
      %26 = sbr.rel (0) target = $region21
    $region20: #{cnn1d_mlp_forward.1} parent=1 // pred_region
      _
    $region21: #{cnn1d_mlp_forward.1} parent=1 // pred_fallthru
      _
    // Predicated region
    $region22: #{cnn1d_mlp_forward.1} parent=1 // pred_check
      _
    $region23: #{cnn1d_mlp_forward.1} parent=1 // pred_check_branch
      %28 = sbr.rel (0) target = $region25
    $region24: #{cnn1d_mlp_forward.1} parent=1 // pred_region
      _
    $region25: #{cnn1d_mlp_forward.1} parent=1 // pred_fallthru
      _
    // Predicated region
    $region26: #{cnn1d_mlp_forward.1} parent=1 // pred_check
      _
    $region27: #{cnn1d_mlp_forward.1} parent=1 // pred_check_branch
      %30 = sbr.rel (0) target = $region29
    $region28: #{cnn1d_mlp_forward.1} parent=1 // pred_region
      _
    $region29: #{cnn1d_mlp_forward.1} parent=1 // pred_fallthru
      _
    // Predicated region
    $region30: #{cnn1d_mlp_forward.1} parent=1 // pred_check
      _
    $region31: #{cnn1d_mlp_forward.1} parent=1 // pred_check_branch
      %32 = sbr.rel (0) target = $region33
    $region32: #{cnn1d_mlp_forward.1} parent=1 // pred_region
      _
    $region33: #{cnn1d_mlp_forward.1} parent=1 // pred_fallthru
      _
    // Predicated region
    $region34: #{cnn1d_mlp_forward.1} parent=1 // pred_check
      _
    $region35: #{cnn1d_mlp_forward.1} parent=1 // pred_check_branch
      %34 = sbr.rel (0) target = $region37
    $region36: #{cnn1d_mlp_forward.1} parent=1 // pred_region
      _
    $region37: #{cnn1d_mlp_forward.1} parent=1 // pred_fallthru
      _
    // Predicated region
    $region38: #{cnn1d_mlp_forward.1} parent=1 // pred_check
      _
    $region39: #{cnn1d_mlp_forward.1} parent=1 // pred_check_branch
      %36 = sbr.rel (0) target = $region41
    $region40: #{cnn1d_mlp_forward.1} parent=1 // pred_region
      _
    $region41: #{cnn1d_mlp_forward.1} parent=1 // pred_fallthru
      _
    // Predicated region
    $region42: #{cnn1d_mlp_forward.1} parent=1 // pred_check
      _
    $region43: #{cnn1d_mlp_forward.1} parent=1 // pred_check_branch
      %38 = sbr.rel (0) target = $region45
    $region44: #{cnn1d_mlp_forward.1} parent=1 // pred_region
      _
    $region45: #{cnn1d_mlp_forward.1} parent=1 // pred_fallthru
      _
    %v39 = vld [vmem:[%s0] sm:$0xff]
    %v40 = vld [vmem:[%s0 + $0x8] sm:$0xff]
    %v41 = vld [vmem:[%s0 + $0x10] sm:$0xff]
    %v42 = vld [vmem:[%s0 + $0x18] sm:$0xff]
    %v43 = vld [vmem:[%s1] sm:$0xff]
    %v44 = vld [vmem:[%s1 + $0x8] sm:$0xf]
    %v45 = vld [vmem:[%s2] sm:$0x1]
    %v47 = vperm.slane %v45, 0
    %vm49 = vcmask 97280
    %v51 = vsel %vm49, %v39, 0
    %v54 = vsel %vm49, %v40, 0
    %v57 = vsel %vm49, %v41, 0
    %v60 = vsel %vm49, %v42, 0
    %vm62 = vcmask 1043456
    %v64 = vsel %vm62, %v44, 0
    %66 = vmatpush.msra.mxu0 0.0
    %67 = vmatpush.msra.mxu0 0.0
    %68 = vmatpush.msra.mxu0 0.0
    %69 = vmatpush.msra.mxu0 0.0
    %70 = vmatpush.msra.mxu0 0.0
    %71 = vmatpush.msra.mxu0 0.0
    %72 = vmatpush.msra.mxu0 0.0
    %73 = vmatpush.msra.mxu0 0.0
    %74 = vmatpush.msra.mxu0 0.0
    %75 = vmatpush.msra.mxu0 0.0
    %76 = vmatpush.msra.mxu0 0.0
    %77 = vmatpush.msra.mxu0 0.0
    %78 = vmatpush.msra.mxu0 0.0
    %79 = vmatpush.msra.mxu0 0.0
    %80 = vmatpush.msra.mxu0 %v64
    %81 = vmatpush.msra.mxu0 %v43
    %82 = vmatmul.f32.gmra.mxu0 %v51
    %v83 = vpop.f32.mrf.mxu0
    %v84 = vadd.f32 %v47, %v83
    %85 = vmatmul.f32.gmra.mxu0 %v54
    %v86 = vpop.f32.mrf.mxu0
    %v87 = vadd.f32 %v47, %v86
    %88 = vmatmul.f32.gmra.mxu0 %v57
    %v89 = vpop.f32.mrf.mxu0
    %v90 = vadd.f32 %v47, %v89
    %91 = vmatmul.f32.gmra.mxu0 %v60
    %v92 = vpop.f32.mrf.mxu0
    %v93 = vadd.f32 %v47, %v92
    %94 = vdwg.mxu0
    %v95 = vmax.f32 %v84, 0.0
    %v96 = vmax.f32 %v87, 0.0
    %v97 = vmax.f32 %v90, 0.0
    %v98 = vmax.f32 %v93, 0.0
    %v99 = vmax.f32 %v95, %v96
    %v100 = vmax.f32 %v97, %v98
    %vm101 = vcmask 64512
    %102 = vst.msk [vmem:[#allocation2] sm:$0xff] %vm101, %v99
    %vm103 = vcmask 58368
    %104 = vst.msk [vmem:[#allocation2 + $0x8] sm:$0x3] %vm103, 0.0
    %105 = vst.msk [vmem:[#allocation3] sm:$0x3] %vm103, 0.0
    %106 = vst.msk [vmem:[#allocation3 + $0x2] sm:$0xff] %vm101, %v100
    %v107 = vld [vmem:[#allocation3] sm:$0xff]
    %v108 = vld [vmem:[#allocation2 + $0x2] sm:$0xff]
    %110 = vrot.lane.b32.xlu0 %v99, 8
    %v111 = vpop.permute.xlu0 %110
    %114 = vrot.lane.b32.xlu0 %v100, 16
    %v115 = vpop.permute.xlu0 %114
    %v117 = vsel %vm101, %v107, %v111
    %vm118 = vcmask 130048
    %v119 = vsel %vm118, %v117, %v115
    %120 = vrot.lane.b32.xlu0 %v100, 8
    %v121 = vpop.permute.xlu0 %120
    %124 = vrot.lane.b32.xlu0 %v108, 16
    %v125 = vpop.permute.xlu0 %124
    %v127 = vsel %vm101, %v99, %v121
    %v128 = vsel %vm118, %v127, %v125
    %v129 = vld [vmem:[%s3] sm:$0xff]
    %v130 = vld [vmem:[%s3 + $0x8] sm:$0xff]
    %v131 = vld [vmem:[%s3 + $0x10] sm:$0xff]
    %v132 = vld [vmem:[%s4] sm:$0x1]
    %v134 = vperm.slane %v132, 0
    %vm136 = vcmask 195584
    %v138 = vsel %vm136, %v119, 0
    %v141 = vsel %vm136, %v128, 0
    %143 = vmatpush.msra.mxu0 0.0
    %144 = vmatpush.msra.mxu0 0.0
    %145 = vmatpush.msra.mxu0 0.0
    %146 = vmatpush.msra.mxu0 0.0
    %147 = vmatpush.msra.mxu0 0.0
    %148 = vmatpush.msra.mxu0 0.0
    %149 = vmatpush.msra.mxu0 0.0
    %150 = vmatpush.msra.mxu0 0.0
    %151 = vmatpush.msra.mxu0 0.0
    %152 = vmatpush.msra.mxu0 0.0
    %153 = vmatpush.msra.mxu0 0.0
    %154 = vmatpush.msra.mxu0 0.0
    %155 = vmatpush.msra.mxu0 0.0
    %156 = vmatpush.msra.mxu0 %v131
    %157 = vmatpush.msra.mxu0 %v130
    %158 = vmatpush.msra.mxu0 %v129
    %159 = vmatmul.f32.gmra.mxu0 %v138
    %v160 = vpop.f32.mrf.mxu0
    %v161 = vadd.f32 %v134, %v160
    %162 = vmatmul.f32.gmra.mxu0 %v141
    %v163 = vpop.f32.mrf.mxu0
    %v164 = vadd.f32 %v134, %v163
    %165 = vdwg.mxu0
    %v166 = vtanh.pop %v161
    %v167 = vtanh.pop %v164
    %v168 = vadd.f32 %v166, %v167
    %v169 = vmul.f32 %v168, 0.5
    %v170 = vld [vmem:[%s5] sm:$0xff]
    %v171 = vld [vmem:[%s5 + $0x8] sm:$0xff]
    %s172 = scalar_lea.vmem %s5, 16
    %v173 = vld [vmem:[%s172] sm:$0xff]
    %v174 = vld [vmem:[%s172 + $0x8] sm:$0xff]
    %v176 = vrot.slane %v169, 2
    %v177 = vsel %vm118, %v176, 0
    %179 = vmatpush.msra.mxu0 0.0
    %180 = vmatpush.msra.mxu0 0.0
    %181 = vmatpush.msra.mxu0 0.0
    %182 = vmatpush.msra.mxu0 0.0
    %183 = vmatpush.msra.mxu0 0.0
    %184 = vmatpush.msra.mxu0 0.0
    %185 = vmatpush.msra.mxu0 0.0
    %186 = vmatpush.msra.mxu0 0.0
    %187 = vmatpush.msra.mxu0 0.0
    %188 = vmatpush.msra.mxu0 0.0
    %189 = vmatpush.msra.mxu0 0.0
    %190 = vmatpush.msra.mxu0 0.0
    %191 = vmatpush.msra.mxu0 0.0
    %192 = vmatpush.msra.mxu0 0.0
    %193 = vmatpush.msra.mxu0 %v174
    %194 = vmatpush.msra.mxu0 %v173
    %195 = vmatmul.f32.gmra.mxu0 %v177
    %v196 = vpop.f32.mrf.mxu0
    %v197 = vadd.f32 0.0, %v196
    %198 = vdwg.mxu0
    %v199 = vsel %vm118, %v169, 0
    %201 = vmatpush.msra.mxu0 0.0
    %202 = vmatpush.msra.mxu0 0.0
    %203 = vmatpush.msra.mxu0 0.0
    %204 = vmatpush.msra.mxu0 0.0
    %205 = vmatpush.msra.mxu0 0.0
    %206 = vmatpush.msra.mxu0 0.0
    %207 = vmatpush.msra.mxu0 0.0
    %208 = vmatpush.msra.mxu0 0.0
    %209 = vmatpush.msra.mxu0 0.0
    %210 = vmatpush.msra.mxu0 0.0
    %211 = vmatpush.msra.mxu0 0.0
    %212 = vmatpush.msra.mxu0 0.0
    %213 = vmatpush.msra.mxu0 0.0
    %214 = vmatpush.msra.mxu0 0.0
    %215 = vmatpush.msra.mxu0 %v171
    %216 = vmatpush.msra.mxu0 %v170
    %217 = vmatmul.f32.gmra.mxu0 %v199
    %v218 = vpop.f32.mrf.mxu0
    %v219 = vadd.f32 %v197, %v218
    %220 = vdwg.mxu0
    %s221 = scalar_lea.vmem %s5, 32
    %v222 = vld [vmem:[%s221] sm:$0xff]
    %v223 = vld [vmem:[%s221 + $0x8] sm:$0xff]
    %v224 = vrot.slane %v169, 4
    %v225 = vsel %vm118, %v224, 0
    %227 = vmatpush.msra.mxu0 0.0
    %228 = vmatpush.msra.mxu0 0.0
    %229 = vmatpush.msra.mxu0 0.0
    %230 = vmatpush.msra.mxu0 0.0
    %231 = vmatpush.msra.mxu0 0.0
    %232 = vmatpush.msra.mxu0 0.0
    %233 = vmatpush.msra.mxu0 0.0
    %234 = vmatpush.msra.mxu0 0.0
    %235 = vmatpush.msra.mxu0 0.0
    %236 = vmatpush.msra.mxu0 0.0
    %237 = vmatpush.msra.mxu0 0.0
    %238 = vmatpush.msra.mxu0 0.0
    %239 = vmatpush.msra.mxu0 0.0
    %240 = vmatpush.msra.mxu0 0.0
    %241 = vmatpush.msra.mxu0 %v223
    %242 = vmatpush.msra.mxu0 %v222
    %243 = vmatmul.f32.gmra.mxu0 %v225
    %v244 = vpop.f32.mrf.mxu0
    %v245 = vadd.f32 0.0, %v244
    %246 = vdwg.mxu0
    %v247 = vadd.f32 %v219, %v245
    %s248 = scalar_lea.vmem %s5, 48
    %v249 = vld [vmem:[%s248] sm:$0xff]
    %v250 = vld [vmem:[%s248 + $0x8] sm:$0xff]
    %v251 = vrot.slane %v169, 6
    %v252 = vsel %vm118, %v251, 0
    %254 = vmatpush.msra.mxu0 0.0
    %255 = vmatpush.msra.mxu0 0.0
    %256 = vmatpush.msra.mxu0 0.0
    %257 = vmatpush.msra.mxu0 0.0
    %258 = vmatpush.msra.mxu0 0.0
    %259 = vmatpush.msra.mxu0 0.0
    %260 = vmatpush.msra.mxu0 0.0
    %261 = vmatpush.msra.mxu0 0.0
    %262 = vmatpush.msra.mxu0 0.0
    %263 = vmatpush.msra.mxu0 0.0
    %264 = vmatpush.msra.mxu0 0.0
    %265 = vmatpush.msra.mxu0 0.0
    %266 = vmatpush.msra.mxu0 0.0
    %267 = vmatpush.msra.mxu0 0.0
    %268 = vmatpush.msra.mxu0 %v250
    %269 = vmatpush.msra.mxu0 %v249
    %270 = vmatmul.f32.gmra.mxu0 %v252
    %v271 = vpop.f32.mrf.mxu0
    %v272 = vadd.f32 0.0, %v271
    %273 = vdwg.mxu0
    %v274 = vadd.f32 %v247, %v272
    %v275 = vld [vmem:[%s6] sm:$0x1]
    %v277 = vperm.slane %v275, 0
    %v279 = vadd.f32 %v274, %v277
    %v280 = vmax.f32 %v279, 0.0
    %v281 = vld [vmem:[%s7] sm:$0xff]
    %v282 = vld [vmem:[%s7 + $0x8] sm:$0xff]
    %v283 = vld [vmem:[%s7 + $0x10] sm:$0xff]
    %v284 = vld [vmem:[%s7 + $0x18] sm:$0xff]
    %v285 = vld [vmem:[%s8] sm:$0x1]
    %v287 = vperm.slane %v285, 0
    %vm289 = vcmask 261120
    %v291 = vsel %vm289, %v280, 0
    %293 = vmatpush.msra.mxu0 0.0
    %294 = vmatpush.msra.mxu0 0.0
    %295 = vmatpush.msra.mxu0 0.0
    %296 = vmatpush.msra.mxu0 0.0
    %297 = vmatpush.msra.mxu0 0.0
    %298 = vmatpush.msra.mxu0 0.0
    %299 = vmatpush.msra.mxu0 0.0
    %300 = vmatpush.msra.mxu0 0.0
    %301 = vmatpush.msra.mxu0 0.0
    %302 = vmatpush.msra.mxu0 0.0
    %303 = vmatpush.msra.mxu0 0.0
    %304 = vmatpush.msra.mxu0 0.0
    %305 = vmatpush.msra.mxu0 %v284
    %306 = vmatpush.msra.mxu0 %v283
    %307 = vmatpush.msra.mxu0 %v282
    %308 = vmatpush.msra.mxu0 %v281
    %309 = vmatmul.f32.gmra.mxu0 %v291
    %v310 = vpop.f32.mrf.mxu0
    %v311 = vadd.f32 %v287, %v310
    %312 = vdwg.mxu0
    %vm313 = vcmp.ge.f32.partialorder %v311, 0.0
    %v314 = vmul.f32 %v311, 0.01
    %v315 = vsel %vm313, %v311, %v314
    %v316 = vld [vmem:[%s9] sm:$0xff]
    %v317 = vld [vmem:[%s9 + $0x8] sm:$0xff]
    %v318 = vld [vmem:[%s10] sm:$0x1]
    %v320 = vperm.slane %v318, 0
    %v323 = vsel %vm118, %v315, 0
    %325 = vmatpush.msra.mxu0 0.0
    %326 = vmatpush.msra.mxu0 0.0
    %327 = vmatpush.msra.mxu0 0.0
    %328 = vmatpush.msra.mxu0 0.0
    %329 = vmatpush.msra.mxu0 0.0
    %330 = vmatpush.msra.mxu0 0.0
    %331 = vmatpush.msra.mxu0 0.0
    %332 = vmatpush.msra.mxu0 0.0
    %333 = vmatpush.msra.mxu0 0.0
    %334 = vmatpush.msra.mxu0 0.0
    %335 = vmatpush.msra.mxu0 0.0
    %336 = vmatpush.msra.mxu0 0.0
    %337 = vmatpush.msra.mxu0 0.0
    %338 = vmatpush.msra.mxu0 0.0
    %339 = vmatpush.msra.mxu0 %v317
    %340 = vmatpush.msra.mxu0 %v316
    %341 = vmatmul.f32.gmra.mxu0 %v323
    %v342 = vpop.f32.mrf.mxu0
    %v343 = vadd.f32 %v320, %v342
    %344 = vdwg.mxu0
    %v345 = vxor.u32 %v343, 2147483648
    %v346 = vmul.f32 %v345, 1.442695
    %v347 = vpow.pop %v346
    %v348 = vadd.f32 %v347, 1.0
    %v349 = vrcp.pop %v348
    %v350 = vmul.f32 %v348, %v349
    %v351 = vsub.f32 1.0, %v350
    %v352 = vmul.f32 %v349, %v351
    %v353 = vadd.f32 %v349, %v352
    %vm354 = vweird.f32 %v348
    %vm355 = vweird.f32 %v349
    %vm356 = vmor %vm354, %vm355
    %v357 = vsel %vm356, %v349, %v353
    %v358 = vand.u32 2147483647, %v348
    %vm359 = vcmp.eq.f32.partialorder %v358, 8.507059e+37
    %v360 = vand.u32 %v348, 2147483648
    %v361 = vor.u32 1.1754944e-38, %v360
    %v362 = vsel %vm359, %v361, %v357
    %v363 = vmul.f32 1.0, %v362
    %vm364 = vcmask 33792
    %365 = vst.msk [vmem:[#allocation4] sm:$0x3] %vm364, %v363
    // Predicated region
    $region46: #{cnn1d_mlp_forward.1} parent=1 // pred_check
      _
    $region47: #{cnn1d_mlp_forward.1} parent=1 // pred_check_branch
      %367 = sbr.rel (0) target = $region49
    $region48: #{cnn1d_mlp_forward.1} parent=1 // pred_region
      %369 = vsyncadd [#allocation5], 0
      %s371 = sshll.u32 [#allocation4], 4
      %s372 = int_to_ptr.vmem [resolvable:$true] %s371
      %s373 = sshll.u32 %s11, 4
      %s374 = int_to_ptr.hbm [resolvable:$true] %s373
      %376 = dma.vmem_to_hbm [thread:$0]  %s372, 32, %s374, [#allocation5]
    $region49: #{cnn1d_mlp_forward.1} parent=1 // pred_fallthru
      _
    // Predicated region
    $region50: #{cnn1d_mlp_forward.1} parent=1 // pred_check
      _
    $region51: #{cnn1d_mlp_forward.1} parent=1 // pred_check_branch
      %378 = sbr.rel (0) target = $region53
    $region52: #{cnn1d_mlp_forward.1} parent=1 // pred_region
      %380 = dma.done [#allocation5], 32
    $region53: #{cnn1d_mlp_forward.1} parent=1 // pred_fallthru
      _
    %381 = vsyncpa [#allocation5], 1

</llo_original>
